<compile_context>
chip_gen: v5e
topology: v5e:2x2
jax: 0.10.0
libtpu: 0.0.40
codegen_flags: <defaults>
</compile_context>

<pallas_src>
import functools

import jax
import jax.numpy as jnp
from jax.experimental import pallas as pl
from jax.experimental.pallas import tpu as pltpu


def _round_up(n, m):
    return ((n + m - 1) // m) * m


def _choose_block_b(B, max_rows=2048):
    """Batch-tile heuristic.

    - Small batches: a single grid step (whole batch, rounded to a sublane
      multiple) — splitting tiny batches across cores only adds per-step
      overhead (~0.35 us/step).
    - Larger batches: tiles of up to `max_rows` rows with an EVEN number of
      grid steps, so the 'parallel' batch axis shards evenly across v7x's two
      TensorCores.  v5e/v6e are single-TC and unaffected.
    """
    if B <= 256:
        return _round_up(B, 8)
    n_steps = max(2, pl.cdiv(B, max_rows))
    if n_steps % 2:
        n_steps += 1
    return _round_up(pl.cdiv(B, n_steps), 8)


def semantic_loss_kernel(x_ref, t_ref, w1_ref, b1_ref, w2_ref, b2_ref, o_ref):
    # ---- MLP map: Linear -> ReLU -> (Dropout = identity, eval mode) -> Linear
    # bf16 MXU operands, f32 accumulation.
    x = x_ref[...].astype(jnp.bfloat16)                                  # (TB, D)
    h = jnp.dot(x, w1_ref[...], preferred_element_type=jnp.float32)      # (TB, Hp)
    h = jnp.maximum(h + b1_ref[...], 0.0)                                # f32 VPU
    y = jnp.dot(h.astype(jnp.bfloat16), w2_ref[...],
                preferred_element_type=jnp.float32) + b2_ref[...]        # (TB, D)

    # ---- cosine loss per row (all f32), exactly the module's formula:
    #      (1 - dot / (||y|| * ||t||)) / 2   — no eps clamp (zero-norm rows
    #      give inf/nan, same as the PyTorch reference).
    t = t_ref[...].astype(jnp.float32)
    dot = jnp.sum(y * t, axis=-1, keepdims=True)                         # (TB, 1)
    inv_ny = jax.lax.rsqrt(jnp.sum(y * y, axis=-1, keepdims=True))       # EUP
    inv_nt = jax.lax.rsqrt(jnp.sum(t * t, axis=-1, keepdims=True))       # EUP
    cos = dot * inv_ny * inv_nt
    o_ref[...] = ((1.0 - cos) * 0.5).astype(o_ref.dtype)


@functools.partial(jax.jit, static_argnames=("block_b",))
def semantic_loss(x, t, w1, b1, w2, b2, *, block_b=None):
    """loss_i = (1 - cos(MLP(x_i), t_i)) / 2, shape (B,).

    x, t: (B, D) — read directly (no pad pass); pass bf16 to halve HBM bytes.
    w1: (D, H), b1: (H,) or (1, H), w2: (H, D), b2: (D,) or (1, D).
    """
    B, D = x.shape
    H = w1.shape[1]

    H_pad = _round_up(H, 128)
    if block_b is None:
        block_b = _choose_block_b(B)
    nb = pl.cdiv(B, block_b)

    # Only the small weights/biases get padded (H -> H_pad), fused with the
    # bf16 cast.  The zero padding is numerically inert for both matmuls.
    w1_p = jnp.pad(w1, ((0, 0), (0, H_pad - H))).astype(jnp.bfloat16)     # (D, Hp)
    w2_p = jnp.pad(w2, ((0, H_pad - H), (0, 0))).astype(jnp.bfloat16)     # (Hp, D)
    b1_p = jnp.pad(jnp.reshape(b1, (1, -1)).astype(jnp.float32),
                   ((0, 0), (0, H_pad - H)))                              # (1, Hp)
    b2_p = jnp.reshape(b2, (1, -1)).astype(jnp.float32)                   # (1, D)

    out = pl.pallas_call(
        semantic_loss_kernel,
        out_shape=jax.ShapeDtypeStruct((B, 1), jnp.float32),
        grid_spec=pltpu.PrefetchScalarGridSpec(
            num_scalar_prefetch=0,
            grid=(nb,),
            in_specs=[
                # x / target: batch-tiled, last block dim == full D (=300).
                # The last grid step may over-cover B; those rows read
                # unspecified data but their outputs are masked on writeback.
                pl.BlockSpec((block_b, D), lambda i: (i, 0)),    # x
                pl.BlockSpec((block_b, D), lambda i: (i, 0)),    # target
                # Grid-resident weights/biases (constant index_map).
                pl.BlockSpec((D, H_pad), lambda i: (0, 0)),      # W1
                pl.BlockSpec((1, H_pad), lambda i: (0, 0)),      # b1
                pl.BlockSpec((H_pad, D), lambda i: (0, 0)),      # W2
                pl.BlockSpec((1, D), lambda i: (0, 0)),          # b2
            ],
            out_specs=pl.BlockSpec((block_b, 1), lambda i: (i, 0)),
        ),
        compiler_params=pltpu.CompilerParams(
            dimension_semantics=("parallel",),
            # Headroom for 2048-row f32 x/t tiles (double-buffered ~10 MiB);
            # needed on v5e (16 MiB scoped default), no-op on v6e/v7x.
            vmem_limit_bytes=32 * 1024 * 1024,
        ),
    )(x, t, w1_p, b1_p, w2_p, b2_p)
    return out[:, 0]  # (B,)


def reference_semantic_loss_f32(x, t, w1, b1, w2, b2):
    """Pure-f32 JAX reference matching the PyTorch module forward (eval mode)."""
    h = jnp.maximum(x @ w1 + jnp.reshape(b1, (1, -1)), 0.0)
    y = h @ w2 + jnp.reshape(b2, (1, -1))
    dot = jnp.sum(y * t, axis=-1)
    cos = dot / (jnp.linalg.norm(y, axis=-1) * jnp.linalg.norm(t, axis=-1))
    return (1.0 - cos) / 2.0


def reference_semantic_loss_bf16(x, t, w1, b1, w2, b2):
    """Reference with the same bf16-matmul / f32-accumulate scheme as the kernel."""
    h = jnp.dot(x.astype(jnp.bfloat16), w1.astype(jnp.bfloat16),
                preferred_element_type=jnp.float32) + jnp.reshape(b1, (1, -1))
    h = jnp.maximum(h, 0.0)
    y = jnp.dot(h.astype(jnp.bfloat16), w2.astype(jnp.bfloat16),
                preferred_element_type=jnp.float32) + jnp.reshape(b2, (1, -1))
    dot = jnp.sum(y * t, axis=-1)
    denom = jnp.sqrt(jnp.sum(y * y, -1)) * jnp.sqrt(jnp.sum(t * t, -1))
    return (1.0 - dot / denom) / 2.0


if __name__ == "__main__":
    # Small shapes consistent with the module: SemanticLoss(input_size=300),
    # hidden = 300, batch = 8.
    B, D, H = 8, 300, 300

    key = jax.random.PRNGKey(0)
    kx, kt, kw1, kb1, kw2, kb2 = jax.random.split(key, 6)

    x = jax.random.normal(kx, (B, D), dtype=jnp.float32)
    t = jax.random.normal(kt, (B, D), dtype=jnp.float32)

    # Deterministic Linear-style init, stored (in, out) so the kernel does x @ W + b.
    bound1 = float(D) ** -0.5
    bound2 = float(H) ** -0.5
    w1 = jax.random.uniform(kw1, (D, H), jnp.float32, -bound1, bound1)
    b1 = jax.random.uniform(kb1, (H,), jnp.float32, -bound1, bound1)
    w2 = jax.random.uniform(kw2, (H, D), jnp.float32, -bound2, bound2)
    b2 = jax.random.uniform(kb2, (D,), jnp.float32, -bound2, bound2)

    out = semantic_loss(x, t, w1, b1, w2, b2)
    out = jax.block_until_ready(out)
    assert out.shape == (B,)

    # Tight check against a reference using the same bf16-matmul scheme.
    ref_bf16 = reference_semantic_loss_bf16(x, t, w1, b1, w2, b2)
    assert jnp.allclose(out, ref_bf16, atol=1e-3, rtol=1e-3), (out, ref_bf16)

    # Loose check against the full-f32 PyTorch-equivalent forward
    # (difference is only bf16 operand quantization in the MXU matmuls).
    ref_f32 = reference_semantic_loss_f32(x, t, w1, b1, w2, b2)
    assert jnp.allclose(out, ref_f32, atol=2e-2, rtol=2e-2), (out, ref_f32)

    print("KERNEL_OK")
</pallas_src>

<mosaic_0001>
module attributes {stable_mosaic.version = 11 : i64} {
  func.func @semantic_loss_kernel(%arg0: i32, %arg1: memref<8x300xf32, #tpu.memory_space<vmem>>, %arg2: memref<8x300xf32, #tpu.memory_space<vmem>>, %arg3: memref<300x384xbf16, #tpu.memory_space<vmem>>, %arg4: memref<1x384xf32, #tpu.memory_space<vmem>>, %arg5: memref<384x300xbf16, #tpu.memory_space<vmem>>, %arg6: memref<1x300xf32, #tpu.memory_space<vmem>>, %arg7: memref<8x1xf32, #tpu.memory_space<vmem>>) attributes {dimension_semantics = [#tpu.dimension_semantics<parallel>], iteration_bounds = array<i64: 1>, scalar_prefetch = 0 : i64, scratch_operands = 0 : i64, tpu.core_type = #tpu.core_type<tc>, window_params = [{transform_indices = @transform_0, window_bounds = array<i64: 8, 300>}, {transform_indices = @transform_1, window_bounds = array<i64: 8, 300>}, {pipeline_mode = #tpu.pipeline_mode<synchronous>, transform_indices = @transform_2, window_bounds = array<i64: 300, 384>}, {pipeline_mode = #tpu.pipeline_mode<synchronous>, transform_indices = @transform_3, window_bounds = array<i64: 1, 384>}, {pipeline_mode = #tpu.pipeline_mode<synchronous>, transform_indices = @transform_4, window_bounds = array<i64: 384, 300>}, {pipeline_mode = #tpu.pipeline_mode<synchronous>, transform_indices = @transform_5, window_bounds = array<i64: 1, 300>}, {transform_indices = @transform_6, window_bounds = array<i64: 8, 1>}]} {
    %c0 = arith.constant 0 : index
    %c0_0 = arith.constant 0 : index
    %0 = vector.load %arg1[%c0, %c0_0] : memref<8x300xf32, #tpu.memory_space<vmem>>, vector<8x300xf32>
    %1 = arith.truncf %0 : vector<8x300xf32> to vector<8x300xbf16>
    %c0_1 = arith.constant 0 : index
    %c0_2 = arith.constant 0 : index
    %2 = vector.load %arg3[%c0_1, %c0_2] : memref<300x384xbf16, #tpu.memory_space<vmem>>, vector<300x384xbf16>
    %cst = arith.constant dense<0.000000e+00> : vector<8x384xf32>
    %3 = tpu.matmul %1, %2, %cst {dimension_numbers = #tpu.dot_dimension_numbers<[1], [0], [0], [1], [0, 0, 1, 1], [], []>} : vector<8x300xbf16>, vector<300x384xbf16>, vector<8x384xf32> -> vector<8x384xf32>
    %c0_3 = arith.constant 0 : index
    %c0_4 = arith.constant 0 : index
    %4 = vector.load %arg4[%c0_3, %c0_4] : memref<1x384xf32, #tpu.memory_space<vmem>>, vector<1x384xf32>
    %5 = vector.broadcast %4 : vector<1x384xf32> to vector<8x384xf32>
    %6 = arith.addf %3, %5 : vector<8x384xf32>
    %cst_5 = arith.constant 0.000000e+00 : f32
    %7 = vector.broadcast %cst_5 : f32 to vector<8x384xf32>
    %8 = arith.maximumf %6, %7 : vector<8x384xf32>
    %9 = arith.truncf %8 : vector<8x384xf32> to vector<8x384xbf16>
    %c0_6 = arith.constant 0 : index
    %c0_7 = arith.constant 0 : index
    %10 = vector.load %arg5[%c0_6, %c0_7] : memref<384x300xbf16, #tpu.memory_space<vmem>>, vector<384x300xbf16>
    %cst_8 = arith.constant dense<0.000000e+00> : vector<8x300xf32>
    %11 = tpu.matmul %9, %10, %cst_8 {dimension_numbers = #tpu.dot_dimension_numbers<[1], [0], [0], [1], [0, 0, 1, 1], [], []>} : vector<8x384xbf16>, vector<384x300xbf16>, vector<8x300xf32> -> vector<8x300xf32>
    %c0_9 = arith.constant 0 : index
    %c0_10 = arith.constant 0 : index
    %12 = vector.load %arg6[%c0_9, %c0_10] : memref<1x300xf32, #tpu.memory_space<vmem>>, vector<1x300xf32>
    %13 = vector.broadcast %12 : vector<1x300xf32> to vector<8x300xf32>
    %14 = arith.addf %11, %13 : vector<8x300xf32>
    %c0_11 = arith.constant 0 : index
    %c0_12 = arith.constant 0 : index
    %15 = vector.load %arg2[%c0_11, %c0_12] : memref<8x300xf32, #tpu.memory_space<vmem>>, vector<8x300xf32>
    %16 = arith.mulf %14, %15 : vector<8x300xf32>
    %cst_13 = arith.constant dense<0.000000e+00> : vector<8xf32>
    %17 = vector.multi_reduction <add>, %16, %cst_13 [1] : vector<8x300xf32> to vector<8xf32>
    %18 = vector.shape_cast %17 : vector<8xf32> to vector<8x1xf32>
    %19 = arith.mulf %14, %14 : vector<8x300xf32>
    %cst_14 = arith.constant dense<0.000000e+00> : vector<8xf32>
    %20 = vector.multi_reduction <add>, %19, %cst_14 [1] : vector<8x300xf32> to vector<8xf32>
    %21 = vector.shape_cast %20 : vector<8xf32> to vector<8x1xf32>
    %22 = math.rsqrt %21 : vector<8x1xf32>
    %23 = arith.mulf %15, %15 : vector<8x300xf32>
    %cst_15 = arith.constant dense<0.000000e+00> : vector<8xf32>
    %24 = vector.multi_reduction <add>, %23, %cst_15 [1] : vector<8x300xf32> to vector<8xf32>
    %25 = vector.shape_cast %24 : vector<8xf32> to vector<8x1xf32>
    %26 = math.rsqrt %25 : vector<8x1xf32>
    %27 = arith.mulf %18, %22 : vector<8x1xf32>
    %28 = arith.mulf %27, %26 : vector<8x1xf32>
    %cst_16 = arith.constant 1.000000e+00 : f32
    %29 = vector.broadcast %cst_16 : f32 to vector<8x1xf32>
    %30 = arith.subf %29, %28 : vector<8x1xf32>
    %cst_17 = arith.constant 5.000000e-01 : f32
    %31 = vector.broadcast %cst_17 : f32 to vector<8x1xf32>
    %32 = arith.mulf %30, %31 : vector<8x1xf32>
    %c0_18 = arith.constant 0 : index
    %c0_19 = arith.constant 0 : index
    %33 = vector.load %arg7[%c0_18, %c0_19] : memref<8x1xf32, #tpu.memory_space<vmem>>, vector<8x1xf32>
    tpu.vector_store %arg7[%c0_18, %c0_19], %32 {strides = array<i32>} : memref<8x1xf32, #tpu.memory_space<vmem>>, vector<8x1xf32>,
    return
  }
  func.func @transform_0(%arg0: i32) -> (i32, i32) {
    %c0_i32 = arith.constant 0 : i32
    %c0_i32_0 = arith.constant 0 : i32
    return %arg0, %c0_i32 : i32, i32
  }
  func.func @transform_1(%arg0: i32) -> (i32, i32) {
    %c0_i32 = arith.constant 0 : i32
    %c0_i32_0 = arith.constant 0 : i32
    return %arg0, %c0_i32 : i32, i32
  }
  func.func @transform_2(%arg0: i32) -> (i32, i32) {
    %c0_i32 = arith.constant 0 : i32
    %c0_i32_0 = arith.constant 0 : i32
    %c0_i32_1 = arith.constant 0 : i32
    return %c0_i32, %c0_i32_0 : i32, i32
  }
  func.func @transform_3(%arg0: i32) -> (i32, i32) {
    %c0_i32 = arith.constant 0 : i32
    %c0_i32_0 = arith.constant 0 : i32
    %c0_i32_1 = arith.constant 0 : i32
    return %c0_i32, %c0_i32_0 : i32, i32
  }
  func.func @transform_4(%arg0: i32) -> (i32, i32) {
    %c0_i32 = arith.constant 0 : i32
    %c0_i32_0 = arith.constant 0 : i32
    %c0_i32_1 = arith.constant 0 : i32
    return %c0_i32, %c0_i32_0 : i32, i32
  }
  func.func @transform_5(%arg0: i32) -> (i32, i32) {
    %c0_i32 = arith.constant 0 : i32
    %c0_i32_0 = arith.constant 0 : i32
    %c0_i32_1 = arith.constant 0 : i32
    return %c0_i32, %c0_i32_0 : i32, i32
  }
  func.func @transform_6(%arg0: i32) -> (i32, i32) {
    %c0_i32 = arith.constant 0 : i32
    %c0_i32_0 = arith.constant 0 : i32
    return %arg0, %c0_i32 : i32, i32
  }
}

</mosaic_0001>

<llo_original>
// kernel: semantic_loss.1
$region0: #{semantic_loss.1}
  #allocation0 [shape = 'u32[]', space=smem, size = 0x4, offset = 0x4, fixed_abs, tag = 'smem constant byte address 0x4 - core index']
  #allocation1 [shape = 'u32[72,128]{1,0:T(1,128)}', space=vmem, size = 0x9000, scoped, tag = 'internal scratch']
  %s0 = inlined_call_operand.vmem [shape: f32[8,300], index: 0, kind: input, shape index: {}]
  %s1 = inlined_call_operand.vmem [shape: f32[8,300], index: 1, kind: input, shape index: {}]
  %s2 = inlined_call_operand.vmem [shape: bf16[300,384], index: 2, kind: input, shape index: {}]
  %s3 = inlined_call_operand.vmem [shape: f32[1,384], index: 3, kind: input, shape index: {}]
  %s4 = inlined_call_operand.vmem [shape: bf16[384,300], index: 4, kind: input, shape index: {}]
  %s5 = inlined_call_operand.vmem [shape: f32[1,300], index: 5, kind: input, shape index: {}]
  %s6 = inlined_call_operand.vmem [shape: f32[8,1], index: 6, kind: output, shape index: {}]
  %s7 = sld [smem:[#allocation0]]
  $region34: #{semantic_loss.1} parent=0
    _
  %s9 = ssub.s32 1, %s7
  %s10 = scalar_select 0, %s9, %s7
  // Predicated region
  $region2: #{semantic_loss.1} parent=0 // pred_check
    _
  $region3: #{semantic_loss.1} parent=0 // pred_check_branch
    %12 = sbr.rel (0) target = $region5
  $region4: #{semantic_loss.1} parent=0 // pred_region
    _
  $region5: #{semantic_loss.1} parent=0 // pred_fallthru
    _
  // Predicated region
  $region6: #{semantic_loss.1} parent=0 // pred_check
    _
  $region7: #{semantic_loss.1} parent=0 // pred_check_branch
    %14 = sbr.rel (0) target = $region9
  $region8: #{semantic_loss.1} parent=0 // pred_region
    _
  $region9: #{semantic_loss.1} parent=0 // pred_fallthru
    _
  // Predicated region
  $region10: #{semantic_loss.1} parent=0 // pred_check
    _
  $region11: #{semantic_loss.1} parent=0 // pred_check_branch
    %16 = sbr.rel (0) target = $region13
  $region12: #{semantic_loss.1} parent=0 // pred_region
    _
  $region13: #{semantic_loss.1} parent=0 // pred_fallthru
    _
  // Predicated region
  $region14: #{semantic_loss.1} parent=0 // pred_check
    _
  $region15: #{semantic_loss.1} parent=0 // pred_check_branch
    %18 = sbr.rel (0) target = $region17
  $region16: #{semantic_loss.1} parent=0 // pred_region
    _
  $region17: #{semantic_loss.1} parent=0 // pred_fallthru
    _
  // Predicated region
  $region18: #{semantic_loss.1} parent=0 // pred_check
    _
  $region19: #{semantic_loss.1} parent=0 // pred_check_branch
    %20 = sbr.rel (0) target = $region21
  $region20: #{semantic_loss.1} parent=0 // pred_region
    _
  $region21: #{semantic_loss.1} parent=0 // pred_fallthru
    _
  // Predicated region
  $region22: #{semantic_loss.1} parent=0 // pred_check
    _
  $region23: #{semantic_loss.1} parent=0 // pred_check_branch
    %22 = sbr.rel (0) target = $region25
  $region24: #{semantic_loss.1} parent=0 // pred_region
    _
  $region25: #{semantic_loss.1} parent=0 // pred_fallthru
    _
  %v24 = vld [vmem:[%s0] sm:$0xff]
  %v25 = vld [vmem:[%s0 + $0x8] sm:$0xff]
  %v26 = vld [vmem:[%s0 + $0x10] sm:$0xff]
  %v27 = vpack.c.bf16 %v24, %v24
  %v28 = vpack.c.bf16 %v25, %v25
  %v29 = vpack.c.bf16 %v26, %v26
  %v30 = vld [vmem:[%s2] sm:$0xff]
  %v31 = vld [vmem:[%s2 + $0x8] sm:$0xf]
  %v32 = vld [vmem:[%s2 + $0xc] sm:$0xff]
  %v33 = vld [vmem:[%s2 + $0x14] sm:$0xf]
  %v34 = vld [vmem:[%s2 + $0x18] sm:$0xff]
  %v35 = vld [vmem:[%s2 + $0x20] sm:$0xf]
  %v36 = vld [vmem:[%s2 + $0x24] sm:$0xff]
  %v37 = vld [vmem:[%s2 + $0x2c] sm:$0xf]
  %v38 = vld [vmem:[%s2 + $0x30] sm:$0xff]
  %v39 = vld [vmem:[%s2 + $0x38] sm:$0xf]
  %v40 = vld [vmem:[%s2 + $0x3c] sm:$0xff]
  %v41 = vld [vmem:[%s2 + $0x44] sm:$0xf]
  %v42 = vld [vmem:[%s2 + $0x48] sm:$0xff]
  %v43 = vld [vmem:[%s2 + $0x50] sm:$0xf]
  %v44 = vld [vmem:[%s2 + $0x54] sm:$0xff]
  %v45 = vld [vmem:[%s2 + $0x5c] sm:$0xf]
  %v46 = vld [vmem:[%s2 + $0x60] sm:$0xff]
  %v47 = vld [vmem:[%s2 + $0x68] sm:$0xf]
  %v48 = vld [vmem:[%s2 + $0x6c] sm:$0xff]
  %v49 = vld [vmem:[%s2 + $0x74] sm:$0xf]
  %v50 = vld [vmem:[%s2 + $0x78] sm:$0xff]
  %v51 = vld [vmem:[%s2 + $0x80] sm:$0xf]
  %v52 = vld [vmem:[%s2 + $0x84] sm:$0xff]
  %v53 = vld [vmem:[%s2 + $0x8c] sm:$0xf]
  %v54 = vld [vmem:[%s2 + $0x90] sm:$0xff]
  %v55 = vld [vmem:[%s2 + $0x98] sm:$0xf]
  %v56 = vld [vmem:[%s2 + $0x9c] sm:$0xff]
  %v57 = vld [vmem:[%s2 + $0xa4] sm:$0xf]
  %v58 = vld [vmem:[%s2 + $0xa8] sm:$0xff]
  %v59 = vld [vmem:[%s2 + $0xb0] sm:$0xf]
  %v60 = vld [vmem:[%s2 + $0xb4] sm:$0xff]
  %v61 = vld [vmem:[%s2 + $0xbc] sm:$0xf]
  %v62 = vld [vmem:[%s2 + $0xc0] sm:$0xff]
  %v63 = vld [vmem:[%s2 + $0xc8] sm:$0xf]
  %v64 = vld [vmem:[%s2 + $0xcc] sm:$0xff]
  %v65 = vld [vmem:[%s2 + $0xd4] sm:$0xf]
  %v66 = vld [vmem:[%s2 + $0xd8] sm:$0xff]
  %v67 = vld [vmem:[%s2 + $0xe0] sm:$0xf]
  %v68 = vld [vmem:[%s2 + $0xe4] sm:$0xff]
  %v69 = vld [vmem:[%s2 + $0xec] sm:$0xf]
  %v70 = vld [vmem:[%s2 + $0xf0] sm:$0xff]
  %v71 = vld [vmem:[%s2 + $0xf8] sm:$0xf]
  %v72 = vld [vmem:[%s2 + $0xfc] sm:$0xff]
  %v73 = vld [vmem:[%s2 + $0x104] sm:$0xf]
  %v74 = vld [vmem:[%s2 + $0x108] sm:$0xff]
  %v75 = vld [vmem:[%s2 + $0x110] sm:$0xf]
  %v76 = vld [vmem:[%s2 + $0x114] sm:$0xff]
  %v77 = vld [vmem:[%s2 + $0x11c] sm:$0xf]
  %v78 = vld [vmem:[%s2 + $0x120] sm:$0xff]
  %v79 = vld [vmem:[%s2 + $0x128] sm:$0xf]
  %v80 = vld [vmem:[%s2 + $0x12c] sm:$0xff]
  %v81 = vld [vmem:[%s2 + $0x134] sm:$0xf]
  %v82 = vld [vmem:[%s2 + $0x138] sm:$0xff]
  %v83 = vld [vmem:[%s2 + $0x140] sm:$0xf]
  %v84 = vld [vmem:[%s2 + $0x144] sm:$0xff]
  %v85 = vld [vmem:[%s2 + $0x14c] sm:$0xf]
  %v86 = vld [vmem:[%s2 + $0x150] sm:$0xff]
  %v87 = vld [vmem:[%s2 + $0x158] sm:$0xf]
  %v88 = vld [vmem:[%s2 + $0x15c] sm:$0xff]
  %v89 = vld [vmem:[%s2 + $0x164] sm:$0xf]
  %v90 = vld [vmem:[%s2 + $0x168] sm:$0xff]
  %v91 = vld [vmem:[%s2 + $0x170] sm:$0xf]
  %v92 = vld [vmem:[%s2 + $0x174] sm:$0xff]
  %v93 = vld [vmem:[%s2 + $0x17c] sm:$0xf]
  %v94 = vld [vmem:[%s2 + $0x180] sm:$0xff]
  %v95 = vld [vmem:[%s2 + $0x188] sm:$0xf]
  %v96 = vld [vmem:[%s2 + $0x18c] sm:$0xff]
  %v97 = vld [vmem:[%s2 + $0x194] sm:$0xf]
  %v98 = vld [vmem:[%s2 + $0x198] sm:$0xff]
  %v99 = vld [vmem:[%s2 + $0x1a0] sm:$0xf]
  %v100 = vld [vmem:[%s2 + $0x1a4] sm:$0xff]
  %v101 = vld [vmem:[%s2 + $0x1ac] sm:$0xf]
  %v102 = vld [vmem:[%s2 + $0x1b0] sm:$0xff]
  %v103 = vld [vmem:[%s2 + $0x1b8] sm:$0xf]
  %v104 = vld [vmem:[%s2 + $0x1bc] sm:$0x33]
  %v105 = vld [vmem:[%s2 + $0x1c4] sm:$0x3]
  %v106 = vld [vmem:[%s3] sm:$0x7]
  %v108 = vperm.slane %v106, 0
  %v109 = vperm.slane %v106, 1
  %v110 = vperm.slane %v106, 2
  %v190 = vunpack.c.l.b16 %v30
  %v191 = vunpack.c.h.b16 %v30
  %v192 = vunpack.c.l.b16 %v31
  %v193 = vunpack.c.l.b16 %v32
  %v194 = vunpack.c.h.b16 %v32
  %v195 = vunpack.c.l.b16 %v33
  %v196 = vunpack.c.l.b16 %v34
  %v197 = vunpack.c.h.b16 %v34
  %v198 = vunpack.c.l.b16 %v35
  %v199 = vunpack.c.l.b16 %v36
  %v200 = vunpack.c.h.b16 %v36
  %v201 = vunpack.c.l.b16 %v37
  %v202 = vunpack.c.l.b16 %v38
  %v203 = vunpack.c.h.b16 %v38
  %v204 = vunpack.c.l.b16 %v39
  %v205 = vunpack.c.l.b16 %v40
  %v206 = vunpack.c.h.b16 %v40
  %v207 = vunpack.c.l.b16 %v41
  %v208 = vunpack.c.l.b16 %v42
  %v209 = vunpack.c.h.b16 %v42
  %v210 = vunpack.c.l.b16 %v43
  %v211 = vunpack.c.l.b16 %v44
  %v212 = vunpack.c.h.b16 %v44
  %v213 = vunpack.c.l.b16 %v45
  %v214 = vunpack.c.l.b16 %v46
  %v215 = vunpack.c.h.b16 %v46
  %v216 = vunpack.c.l.b16 %v47
  %v217 = vunpack.c.l.b16 %v48
  %v218 = vunpack.c.h.b16 %v48
  %v219 = vunpack.c.l.b16 %v49
  %v220 = vunpack.c.l.b16 %v50
  %v221 = vunpack.c.h.b16 %v50
  %v222 = vunpack.c.l.b16 %v51
  %v223 = vunpack.c.l.b16 %v52
  %v224 = vunpack.c.h.b16 %v52
  %v225 = vunpack.c.l.b16 %v53
  %v226 = vunpack.c.l.b16 %v54
  %v227 = vunpack.c.h.b16 %v54
  %v228 = vunpack.c.l.b16 %v55
  %v229 = vunpack.c.l.b16 %v56
  %v230 = vunpack.c.h.b16 %v56
  %v231 = vunpack.c.l.b16 %v57
  %v232 = vunpack.c.l.b16 %v58
  %v233 = vunpack.c.h.b16 %v58
  %v234 = vunpack.c.l.b16 %v59
  %v235 = vunpack.c.l.b16 %v60
  %v236 = vunpack.c.h.b16 %v60
  %v237 = vunpack.c.l.b16 %v61
  %v238 = vunpack.c.l.b16 %v62
  %v239 = vunpack.c.h.b16 %v62
  %v240 = vunpack.c.l.b16 %v63
  %v241 = vunpack.c.l.b16 %v64
  %v242 = vunpack.c.h.b16 %v64
  %v243 = vunpack.c.l.b16 %v65
  %v244 = vunpack.c.l.b16 %v66
  %v245 = vunpack.c.h.b16 %v66
  %v246 = vunpack.c.l.b16 %v67
  %v247 = vunpack.c.l.b16 %v68
  %v248 = vunpack.c.h.b16 %v68
  %v249 = vunpack.c.l.b16 %v69
  %v250 = vunpack.c.l.b16 %v70
  %v251 = vunpack.c.h.b16 %v70
  %v252 = vunpack.c.l.b16 %v71
  %v253 = vunpack.c.l.b16 %v72
  %v254 = vunpack.c.h.b16 %v72
  %v255 = vunpack.c.l.b16 %v73
  %v256 = vunpack.c.l.b16 %v74
  %v257 = vunpack.c.h.b16 %v74
  %v258 = vunpack.c.l.b16 %v75
  %v259 = vunpack.c.l.b16 %v76
  %v260 = vunpack.c.h.b16 %v76
  %v261 = vunpack.c.l.b16 %v77
  %v262 = vunpack.c.l.b16 %v78
  %v263 = vunpack.c.h.b16 %v78
  %v264 = vunpack.c.l.b16 %v79
  %v265 = vunpack.c.l.b16 %v80
  %v266 = vunpack.c.h.b16 %v80
  %v267 = vunpack.c.l.b16 %v81
  %v268 = vunpack.c.l.b16 %v82
  %v269 = vunpack.c.h.b16 %v82
  %v270 = vunpack.c.l.b16 %v83
  %v271 = vunpack.c.l.b16 %v84
  %v272 = vunpack.c.h.b16 %v84
  %v273 = vunpack.c.l.b16 %v85
  %v274 = vunpack.c.l.b16 %v86
  %v275 = vunpack.c.h.b16 %v86
  %v276 = vunpack.c.l.b16 %v87
  %v277 = vunpack.c.l.b16 %v88
  %v278 = vunpack.c.h.b16 %v88
  %v279 = vunpack.c.l.b16 %v89
  %v280 = vunpack.c.l.b16 %v90
  %v281 = vunpack.c.h.b16 %v90
  %v282 = vunpack.c.l.b16 %v91
  %v283 = vunpack.c.l.b16 %v92
  %v284 = vunpack.c.h.b16 %v92
  %v285 = vunpack.c.l.b16 %v93
  %v286 = vunpack.c.l.b16 %v94
  %v287 = vunpack.c.h.b16 %v94
  %v288 = vunpack.c.l.b16 %v95
  %v289 = vunpack.c.l.b16 %v96
  %v290 = vunpack.c.h.b16 %v96
  %v291 = vunpack.c.l.b16 %v97
  %v292 = vunpack.c.l.b16 %v98
  %v293 = vunpack.c.h.b16 %v98
  %v294 = vunpack.c.l.b16 %v99
  %v295 = vunpack.c.l.b16 %v100
  %v296 = vunpack.c.h.b16 %v100
  %v297 = vunpack.c.l.b16 %v101
  %v298 = vunpack.c.l.b16 %v102
  %v299 = vunpack.c.h.b16 %v102
  %v300 = vunpack.c.l.b16 %v103
  %v301 = vunpack.c.l.b16 %v104
  %v302 = vunpack.c.h.b16 %v104
  %v303 = vunpack.c.l.b16 %v105
  %v304 = vpack.c.b16 %v193, %v190
  %v305 = vpack.c.b16 %v194, %v191
  %v306 = vpack.c.b16 %v195, %v192
  %v307 = vpack.c.b16 %v199, %v196
  %v308 = vpack.c.b16 %v200, %v197
  %v309 = vpack.c.b16 %v201, %v198
  %v310 = vpack.c.b16 %v205, %v202
  %v311 = vpack.c.b16 %v206, %v203
  %v312 = vpack.c.b16 %v207, %v204
  %v313 = vpack.c.b16 %v211, %v208
  %v314 = vpack.c.b16 %v212, %v209
  %v315 = vpack.c.b16 %v213, %v210
  %v316 = vpack.c.b16 %v217, %v214
  %v317 = vpack.c.b16 %v218, %v215
  %v318 = vpack.c.b16 %v219, %v216
  %v319 = vpack.c.b16 %v223, %v220
  %v320 = vpack.c.b16 %v224, %v221
  %v321 = vpack.c.b16 %v225, %v222
  %v322 = vpack.c.b16 %v229, %v226
  %v323 = vpack.c.b16 %v230, %v227
  %v324 = vpack.c.b16 %v231, %v228
  %v325 = vpack.c.b16 %v235, %v232
  %v326 = vpack.c.b16 %v236, %v233
  %v327 = vpack.c.b16 %v237, %v234
  %v328 = vpack.c.b16 %v241, %v238
  %v329 = vpack.c.b16 %v242, %v239
  %v330 = vpack.c.b16 %v243, %v240
  %v331 = vpack.c.b16 %v247, %v244
  %v332 = vpack.c.b16 %v248, %v245
  %v333 = vpack.c.b16 %v249, %v246
  %v334 = vpack.c.b16 %v253, %v250
  %v335 = vpack.c.b16 %v254, %v251
  %v336 = vpack.c.b16 %v255, %v252
  %v337 = vpack.c.b16 %v259, %v256
  %v338 = vpack.c.b16 %v260, %v257
  %v339 = vpack.c.b16 %v261, %v258
  %v340 = vpack.c.b16 %v265, %v262
  %v341 = vpack.c.b16 %v266, %v263
  %v342 = vpack.c.b16 %v267, %v264
  %v343 = vpack.c.b16 %v271, %v268
  %v344 = vpack.c.b16 %v272, %v269
  %v345 = vpack.c.b16 %v273, %v270
  %v346 = vpack.c.b16 %v277, %v274
  %v347 = vpack.c.b16 %v278, %v275
  %v348 = vpack.c.b16 %v279, %v276
  %v349 = vpack.c.b16 %v283, %v280
  %v350 = vpack.c.b16 %v284, %v281
  %v351 = vpack.c.b16 %v285, %v282
  %v352 = vpack.c.b16 %v289, %v286
  %v353 = vpack.c.b16 %v290, %v287
  %v354 = vpack.c.b16 %v291, %v288
  %v355 = vpack.c.b16 %v295, %v292
  %v356 = vpack.c.b16 %v296, %v293
  %v357 = vpack.c.b16 %v297, %v294
  %v358 = vpack.c.b16 %v301, %v298
  %v359 = vpack.c.b16 %v302, %v299
  %v360 = vpack.c.b16 %v303, %v300
  %vm415 = vcmask 359424
  %v417 = vsel %vm415, %v29, 0
  %vm419 = vcmask 1045504
  %v421 = vsel %vm419, %v358, 0
  %v424 = vsel %vm419, %v359, 0
  %v427 = vsel %vm419, %v360, 0
  %429 = vmatpush.bf16.msra.mxu0 %v325
  %430 = vmatpush.bf16.msra.mxu0 %v322
  %431 = vmatpush.bf16.msra.mxu0 %v319
  %432 = vmatpush.bf16.msra.mxu0 %v316
  %433 = vmatpush.bf16.msra.mxu0 %v313
  %434 = vmatpush.bf16.msra.mxu0 %v310
  %435 = vmatpush.bf16.msra.mxu0 %v307
  %436 = vmatpush.bf16.msra.mxu0 %v304
  %437 = vmatmul.bf16.gmra.mxu0 %v27
  %v438 = vpop.f32.mrf.mxu0
  %v439 = vadd.f32 %v108, %v438
  %v440 = vpop.f32.mrf.mxu0
  %441 = vdwg.mxu0
  %442 = vmatpush.bf16.msra.mxu0 %v349
  %443 = vmatpush.bf16.msra.mxu0 %v346
  %444 = vmatpush.bf16.msra.mxu0 %v343
  %445 = vmatpush.bf16.msra.mxu0 %v340
  %446 = vmatpush.bf16.msra.mxu0 %v337
  %447 = vmatpush.bf16.msra.mxu0 %v334
  %448 = vmatpush.bf16.msra.mxu0 %v331
  %449 = vmatpush.bf16.msra.mxu0 %v328
  %450 = vmatmul.bf16.gmra.mxu0 %v28
  %v451 = vpop.f32.mrf.mxu0
  %v452 = vadd.f32 %v439, %v451
  %v453 = vpop.f32.mrf.mxu0
  %454 = vdwg.mxu0
  %455 = vmatpush.bf16.msra.mxu0 0
  %456 = vmatpush.bf16.msra.mxu0 0
  %457 = vmatpush.bf16.msra.mxu0 0
  %458 = vmatpush.bf16.msra.mxu0 0
  %459 = vmatpush.bf16.msra.mxu0 0
  %460 = vmatpush.bf16.msra.mxu0 %v421
  %461 = vmatpush.bf16.msra.mxu0 %v355
  %462 = vmatpush.bf16.msra.mxu0 %v352
  %463 = vmatmul.bf16.gmra.mxu0 %v417
  %v464 = vpop.f32.mrf.mxu0
  %v465 = vadd.f32 %v452, %v464
  %v466 = vpop.f32.mrf.mxu0
  %467 = vdwg.mxu0
  %468 = vmatpush.bf16.msra.mxu0 %v326
  %469 = vmatpush.bf16.msra.mxu0 %v323
  %470 = vmatpush.bf16.msra.mxu0 %v320
  %471 = vmatpush.bf16.msra.mxu0 %v317
  %472 = vmatpush.bf16.msra.mxu0 %v314
  %473 = vmatpush.bf16.msra.mxu0 %v311
  %474 = vmatpush.bf16.msra.mxu0 %v308
  %475 = vmatpush.bf16.msra.mxu0 %v305
  %476 = vmatmul.bf16.gmra.mxu0 %v27
  %v477 = vpop.f32.mrf.mxu0
  %v478 = vadd.f32 %v109, %v477
  %v479 = vpop.f32.mrf.mxu0
  %480 = vdwg.mxu0
  %481 = vmatpush.bf16.msra.mxu0 %v350
  %482 = vmatpush.bf16.msra.mxu0 %v347
  %483 = vmatpush.bf16.msra.mxu0 %v344
  %484 = vmatpush.bf16.msra.mxu0 %v341
  %485 = vmatpush.bf16.msra.mxu0 %v338
  %486 = vmatpush.bf16.msra.mxu0 %v335
  %487 = vmatpush.bf16.msra.mxu0 %v332
  %488 = vmatpush.bf16.msra.mxu0 %v329
  %489 = vmatmul.bf16.gmra.mxu0 %v28
  %v490 = vpop.f32.mrf.mxu0
  %v491 = vadd.f32 %v478, %v490
  %v492 = vpop.f32.mrf.mxu0
  %493 = vdwg.mxu0
  %494 = vmatpush.bf16.msra.mxu0 0
  %495 = vmatpush.bf16.msra.mxu0 0
  %496 = vmatpush.bf16.msra.mxu0 0
  %497 = vmatpush.bf16.msra.mxu0 0
  %498 = vmatpush.bf16.msra.mxu0 0
  %499 = vmatpush.bf16.msra.mxu0 %v424
  %500 = vmatpush.bf16.msra.mxu0 %v356
  %501 = vmatpush.bf16.msra.mxu0 %v353
  %502 = vmatmul.bf16.gmra.mxu0 %v417
  %v503 = vpop.f32.mrf.mxu0
  %v504 = vadd.f32 %v491, %v503
  %v505 = vpop.f32.mrf.mxu0
  %506 = vdwg.mxu0
  %507 = vmatpush.bf16.msra.mxu0 %v327
  %508 = vmatpush.bf16.msra.mxu0 %v324
  %509 = vmatpush.bf16.msra.mxu0 %v321
  %510 = vmatpush.bf16.msra.mxu0 %v318
  %511 = vmatpush.bf16.msra.mxu0 %v315
  %512 = vmatpush.bf16.msra.mxu0 %v312
  %513 = vmatpush.bf16.msra.mxu0 %v309
  %514 = vmatpush.bf16.msra.mxu0 %v306
  %515 = vmatmul.bf16.gmra.mxu0 %v27
  %v516 = vpop.f32.mrf.mxu0
  %v517 = vadd.f32 %v110, %v516
  %v518 = vpop.f32.mrf.mxu0
  %519 = vdwg.mxu0
  %520 = vmatpush.bf16.msra.mxu0 %v351
  %521 = vmatpush.bf16.msra.mxu0 %v348
  %522 = vmatpush.bf16.msra.mxu0 %v345
  %523 = vmatpush.bf16.msra.mxu0 %v342
  %524 = vmatpush.bf16.msra.mxu0 %v339
  %525 = vmatpush.bf16.msra.mxu0 %v336
  %526 = vmatpush.bf16.msra.mxu0 %v333
  %527 = vmatpush.bf16.msra.mxu0 %v330
  %528 = vmatmul.bf16.gmra.mxu0 %v28
  %v529 = vpop.f32.mrf.mxu0
  %v530 = vadd.f32 %v517, %v529
  %v531 = vpop.f32.mrf.mxu0
  %532 = vdwg.mxu0
  %533 = vmatpush.bf16.msra.mxu0 0
  %534 = vmatpush.bf16.msra.mxu0 0
  %535 = vmatpush.bf16.msra.mxu0 0
  %536 = vmatpush.bf16.msra.mxu0 0
  %537 = vmatpush.bf16.msra.mxu0 0
  %538 = vmatpush.bf16.msra.mxu0 %v427
  %539 = vmatpush.bf16.msra.mxu0 %v357
  %540 = vmatpush.bf16.msra.mxu0 %v354
  %541 = vmatmul.bf16.gmra.mxu0 %v417
  %v542 = vpop.f32.mrf.mxu0
  %v543 = vadd.f32 %v530, %v542
  %v544 = vpop.f32.mrf.mxu0
  %545 = vdwg.mxu0
  %v546 = vmax.f32 %v465, 0.0
  %v547 = vmax.f32 %v504, 0.0
  %v548 = vmax.f32 %v543, 0.0
  %v549 = vpack.c.bf16 %v546, %v546
  %v550 = vpack.c.bf16 %v547, %v547
  %v551 = vpack.c.bf16 %v548, %v548
  %v552 = vld [vmem:[%s4] sm:$0xff]
  %v553 = vld [vmem:[%s4 + $0x8] sm:$0xf]
  %v554 = vld [vmem:[%s4 + $0xc] sm:$0xff]
  %v555 = vld [vmem:[%s4 + $0x14] sm:$0xf]
  %v556 = vld [vmem:[%s4 + $0x18] sm:$0xff]
  %v557 = vld [vmem:[%s4 + $0x20] sm:$0xf]
  %v558 = vld [vmem:[%s4 + $0x24] sm:$0xff]
  %v559 = vld [vmem:[%s4 + $0x2c] sm:$0xf]
  %v560 = vld [vmem:[%s4 + $0x30] sm:$0xff]
  %v561 = vld [vmem:[%s4 + $0x38] sm:$0xf]
  %v562 = vld [vmem:[%s4 + $0x3c] sm:$0xff]
  %v563 = vld [vmem:[%s4 + $0x44] sm:$0xf]
  %v564 = vld [vmem:[%s4 + $0x48] sm:$0xff]
  %v565 = vld [vmem:[%s4 + $0x50] sm:$0xf]
  %v566 = vld [vmem:[%s4 + $0x54] sm:$0xff]
  %v567 = vld [vmem:[%s4 + $0x5c] sm:$0xf]
  %v568 = vld [vmem:[%s4 + $0x60] sm:$0xff]
  %v569 = vld [vmem:[%s4 + $0x68] sm:$0xf]
  %v570 = vld [vmem:[%s4 + $0x6c] sm:$0xff]
  %v571 = vld [vmem:[%s4 + $0x74] sm:$0xf]
  %v572 = vld [vmem:[%s4 + $0x78] sm:$0xff]
  %v573 = vld [vmem:[%s4 + $0x80] sm:$0xf]
  %v574 = vld [vmem:[%s4 + $0x84] sm:$0xff]
  %v575 = vld [vmem:[%s4 + $0x8c] sm:$0xf]
  %v576 = vld [vmem:[%s4 + $0x90] sm:$0xff]
  %v577 = vld [vmem:[%s4 + $0x98] sm:$0xf]
  %v578 = vld [vmem:[%s4 + $0x9c] sm:$0xff]
  %v579 = vld [vmem:[%s4 + $0xa4] sm:$0xf]
  %v580 = vld [vmem:[%s4 + $0xa8] sm:$0xff]
  %v581 = vld [vmem:[%s4 + $0xb0] sm:$0xf]
  %v582 = vld [vmem:[%s4 + $0xb4] sm:$0xff]
  %v583 = vld [vmem:[%s4 + $0xbc] sm:$0xf]
  %v584 = vld [vmem:[%s4 + $0xc0] sm:$0xff]
  %v585 = vld [vmem:[%s4 + $0xc8] sm:$0xf]
  %v586 = vld [vmem:[%s4 + $0xcc] sm:$0xff]
  %v587 = vld [vmem:[%s4 + $0xd4] sm:$0xf]
  %v588 = vld [vmem:[%s4 + $0xd8] sm:$0xff]
  %v589 = vld [vmem:[%s4 + $0xe0] sm:$0xf]
  %v590 = vld [vmem:[%s4 + $0xe4] sm:$0xff]
  %v591 = vld [vmem:[%s4 + $0xec] sm:$0xf]
  %v592 = vld [vmem:[%s4 + $0xf0] sm:$0xff]
  %v593 = vld [vmem:[%s4 + $0xf8] sm:$0xf]
  %v594 = vld [vmem:[%s4 + $0xfc] sm:$0xff]
  %v595 = vld [vmem:[%s4 + $0x104] sm:$0xf]
  %v596 = vld [vmem:[%s4 + $0x108] sm:$0xff]
  %v597 = vld [vmem:[%s4 + $0x110] sm:$0xf]
  %v598 = vld [vmem:[%s4 + $0x114] sm:$0xff]
  %v599 = vld [vmem:[%s4 + $0x11c] sm:$0xf]
  %v600 = vld [vmem:[%s4 + $0x120] sm:$0xff]
  %v601 = vld [vmem:[%s4 + $0x128] sm:$0xf]
  %v602 = vld [vmem:[%s4 + $0x12c] sm:$0xff]
  %v603 = vld [vmem:[%s4 + $0x134] sm:$0xf]
  %v604 = vld [vmem:[%s4 + $0x138] sm:$0xff]
  %v605 = vld [vmem:[%s4 + $0x140] sm:$0xf]
  %v606 = vld [vmem:[%s4 + $0x144] sm:$0xff]
  %v607 = vld [vmem:[%s4 + $0x14c] sm:$0xf]
  %v608 = vld [vmem:[%s4 + $0x150] sm:$0xff]
  %v609 = vld [vmem:[%s4 + $0x158] sm:$0xf]
  %v610 = vld [vmem:[%s4 + $0x15c] sm:$0xff]
  %v611 = vld [vmem:[%s4 + $0x164] sm:$0xf]
  %v612 = vld [vmem:[%s4 + $0x168] sm:$0xff]
  %v613 = vld [vmem:[%s4 + $0x170] sm:$0xf]
  %v614 = vld [vmem:[%s4 + $0x174] sm:$0xff]
  %v615 = vld [vmem:[%s4 + $0x17c] sm:$0xf]
  %v616 = vld [vmem:[%s4 + $0x180] sm:$0xff]
  %v617 = vld [vmem:[%s4 + $0x188] sm:$0xf]
  %v618 = vld [vmem:[%s4 + $0x18c] sm:$0xff]
  %v619 = vld [vmem:[%s4 + $0x194] sm:$0xf]
  %v620 = vld [vmem:[%s4 + $0x198] sm:$0xff]
  %v621 = vld [vmem:[%s4 + $0x1a0] sm:$0xf]
  %v622 = vld [vmem:[%s4 + $0x1a4] sm:$0xff]
  %v623 = vld [vmem:[%s4 + $0x1ac] sm:$0xf]
  %v624 = vld [vmem:[%s4 + $0x1b0] sm:$0xff]
  %v625 = vld [vmem:[%s4 + $0x1b8] sm:$0xf]
  %v626 = vld [vmem:[%s4 + $0x1bc] sm:$0xff]
  %v627 = vld [vmem:[%s4 + $0x1c4] sm:$0xf]
  %v628 = vld [vmem:[%s4 + $0x1c8] sm:$0xff]
  %v629 = vld [vmem:[%s4 + $0x1d0] sm:$0xf]
  %v630 = vld [vmem:[%s4 + $0x1d4] sm:$0xff]
  %v631 = vld [vmem:[%s4 + $0x1dc] sm:$0xf]
  %v632 = vld [vmem:[%s4 + $0x1e0] sm:$0xff]
  %v633 = vld [vmem:[%s4 + $0x1e8] sm:$0xf]
  %v634 = vld [vmem:[%s4 + $0x1ec] sm:$0xff]
  %v635 = vld [vmem:[%s4 + $0x1f4] sm:$0xf]
  %v636 = vld [vmem:[%s4 + $0x1f8] sm:$0xff]
  %v637 = vld [vmem:[%s4 + $0x200] sm:$0xf]
  %v638 = vld [vmem:[%s4 + $0x204] sm:$0xff]
  %v639 = vld [vmem:[%s4 + $0x20c] sm:$0xf]
  %v640 = vld [vmem:[%s4 + $0x210] sm:$0xff]
  %v641 = vld [vmem:[%s4 + $0x218] sm:$0xf]
  %v642 = vld [vmem:[%s4 + $0x21c] sm:$0xff]
  %v643 = vld [vmem:[%s4 + $0x224] sm:$0xf]
  %v644 = vld [vmem:[%s4 + $0x228] sm:$0xff]
  %v645 = vld [vmem:[%s4 + $0x230] sm:$0xf]
  %v646 = vld [vmem:[%s4 + $0x234] sm:$0xff]
  %v647 = vld [vmem:[%s4 + $0x23c] sm:$0xf]
  %v648 = vld [vmem:[%s5] sm:$0x7]
  %v650 = vperm.slane %v648, 0
  %v651 = vperm.slane %v648, 1
  %v652 = vperm.slane %v648, 2
  %v752 = vunpack.c.l.b16 %v552
  %v753 = vunpack.c.h.b16 %v552
  %v754 = vunpack.c.l.b16 %v553
  %v755 = vunpack.c.l.b16 %v554
  %v756 = vunpack.c.h.b16 %v554
  %v757 = vunpack.c.l.b16 %v555
  %v758 = vunpack.c.l.b16 %v556
  %v759 = vunpack.c.h.b16 %v556
  %v760 = vunpack.c.l.b16 %v557
  %v761 = vunpack.c.l.b16 %v558
  %v762 = vunpack.c.h.b16 %v558
  %v763 = vunpack.c.l.b16 %v559
  %v764 = vunpack.c.l.b16 %v560
  %v765 = vunpack.c.h.b16 %v560
  %v766 = vunpack.c.l.b16 %v561
  %v767 = vunpack.c.l.b16 %v562
  %v768 = vunpack.c.h.b16 %v562
  %v769 = vunpack.c.l.b16 %v563
  %v770 = vunpack.c.l.b16 %v564
  %v771 = vunpack.c.h.b16 %v564
  %v772 = vunpack.c.l.b16 %v565
  %v773 = vunpack.c.l.b16 %v566
  %v774 = vunpack.c.h.b16 %v566
  %v775 = vunpack.c.l.b16 %v567
  %v776 = vunpack.c.l.b16 %v568
  %v777 = vunpack.c.h.b16 %v568
  %v778 = vunpack.c.l.b16 %v569
  %v779 = vunpack.c.l.b16 %v570
  %v780 = vunpack.c.h.b16 %v570
  %v781 = vunpack.c.l.b16 %v571
  %v782 = vunpack.c.l.b16 %v572
  %v783 = vunpack.c.h.b16 %v572
  %v784 = vunpack.c.l.b16 %v573
  %v785 = vunpack.c.l.b16 %v574
  %v786 = vunpack.c.h.b16 %v574
  %v787 = vunpack.c.l.b16 %v575
  %v788 = vunpack.c.l.b16 %v576
  %v789 = vunpack.c.h.b16 %v576
  %v790 = vunpack.c.l.b16 %v577
  %v791 = vunpack.c.l.b16 %v578
  %v792 = vunpack.c.h.b16 %v578
  %v793 = vunpack.c.l.b16 %v579
  %v794 = vunpack.c.l.b16 %v580
  %v795 = vunpack.c.h.b16 %v580
  %v796 = vunpack.c.l.b16 %v581
  %v797 = vunpack.c.l.b16 %v582
  %v798 = vunpack.c.h.b16 %v582
  %v799 = vunpack.c.l.b16 %v583
  %v800 = vunpack.c.l.b16 %v584
  %v801 = vunpack.c.h.b16 %v584
  %v802 = vunpack.c.l.b16 %v585
  %v803 = vunpack.c.l.b16 %v586
  %v804 = vunpack.c.h.b16 %v586
  %v805 = vunpack.c.l.b16 %v587
  %v806 = vunpack.c.l.b16 %v588
  %v807 = vunpack.c.h.b16 %v588
  %v808 = vunpack.c.l.b16 %v589
  %v809 = vunpack.c.l.b16 %v590
  %v810 = vunpack.c.h.b16 %v590
  %v811 = vunpack.c.l.b16 %v591
  %v812 = vunpack.c.l.b16 %v592
  %v813 = vunpack.c.h.b16 %v592
  %v814 = vunpack.c.l.b16 %v593
  %v815 = vunpack.c.l.b16 %v594
  %v816 = vunpack.c.h.b16 %v594
  %v817 = vunpack.c.l.b16 %v595
  %v818 = vunpack.c.l.b16 %v596
  %v819 = vunpack.c.h.b16 %v596
  %v820 = vunpack.c.l.b16 %v597
  %v821 = vunpack.c.l.b16 %v598
  %v822 = vunpack.c.h.b16 %v598
  %v823 = vunpack.c.l.b16 %v599
  %v824 = vunpack.c.l.b16 %v600
  %v825 = vunpack.c.h.b16 %v600
  %v826 = vunpack.c.l.b16 %v601
  %v827 = vunpack.c.l.b16 %v602
  %v828 = vunpack.c.h.b16 %v602
  %v829 = vunpack.c.l.b16 %v603
  %v830 = vunpack.c.l.b16 %v604
  %v831 = vunpack.c.h.b16 %v604
  %v832 = vunpack.c.l.b16 %v605
  %v833 = vunpack.c.l.b16 %v606
  %v834 = vunpack.c.h.b16 %v606
  %v835 = vunpack.c.l.b16 %v607
  %v836 = vunpack.c.l.b16 %v608
  %v837 = vunpack.c.h.b16 %v608
  %v838 = vunpack.c.l.b16 %v609
  %v839 = vunpack.c.l.b16 %v610
  %v840 = vunpack.c.h.b16 %v610
  %v841 = vunpack.c.l.b16 %v611
  %v842 = vunpack.c.l.b16 %v612
  %v843 = vunpack.c.h.b16 %v612
  %v844 = vunpack.c.l.b16 %v613
  %v845 = vunpack.c.l.b16 %v614
  %v846 = vunpack.c.h.b16 %v614
  %v847 = vunpack.c.l.b16 %v615
  %v848 = vunpack.c.l.b16 %v616
  %v849 = vunpack.c.h.b16 %v616
  %v850 = vunpack.c.l.b16 %v617
  %v851 = vunpack.c.l.b16 %v618
  %v852 = vunpack.c.h.b16 %v618
  %v853 = vunpack.c.l.b16 %v619
  %v854 = vunpack.c.l.b16 %v620
  %v855 = vunpack.c.h.b16 %v620
  %v856 = vunpack.c.l.b16 %v621
  %v857 = vunpack.c.l.b16 %v622
  %v858 = vunpack.c.h.b16 %v622
  %v859 = vunpack.c.l.b16 %v623
  %v860 = vunpack.c.l.b16 %v624
  %v861 = vunpack.c.h.b16 %v624
  %v862 = vunpack.c.l.b16 %v625
  %v863 = vunpack.c.l.b16 %v626
  %v864 = vunpack.c.h.b16 %v626
  %v865 = vunpack.c.l.b16 %v627
  %v866 = vunpack.c.l.b16 %v628
  %v867 = vunpack.c.h.b16 %v628
  %v868 = vunpack.c.l.b16 %v629
  %v869 = vunpack.c.l.b16 %v630
  %v870 = vunpack.c.h.b16 %v630
  %v871 = vunpack.c.l.b16 %v631
  %v872 = vunpack.c.l.b16 %v632
  %v873 = vunpack.c.h.b16 %v632
  %v874 = vunpack.c.l.b16 %v633
  %v875 = vunpack.c.l.b16 %v634
  %v876 = vunpack.c.h.b16 %v634
  %v877 = vunpack.c.l.b16 %v635
  %v878 = vunpack.c.l.b16 %v636
  %v879 = vunpack.c.h.b16 %v636
  %v880 = vunpack.c.l.b16 %v637
  %v881 = vunpack.c.l.b16 %v638
  %v882 = vunpack.c.h.b16 %v638
  %v883 = vunpack.c.l.b16 %v639
  %v884 = vunpack.c.l.b16 %v640
  %v885 = vunpack.c.h.b16 %v640
  %v886 = vunpack.c.l.b16 %v641
  %v887 = vunpack.c.l.b16 %v642
  %v888 = vunpack.c.h.b16 %v642
  %v889 = vunpack.c.l.b16 %v643
  %v890 = vunpack.c.l.b16 %v644
  %v891 = vunpack.c.h.b16 %v644
  %v892 = vunpack.c.l.b16 %v645
  %v893 = vunpack.c.l.b16 %v646
  %v894 = vunpack.c.h.b16 %v646
  %v895 = vunpack.c.l.b16 %v647
  %v896 = vpack.c.b16 %v755, %v752
  %v897 = vpack.c.b16 %v756, %v753
  %v898 = vpack.c.b16 %v757, %v754
  %v899 = vpack.c.b16 %v761, %v758
  %v900 = vpack.c.b16 %v762, %v759
  %v901 = vpack.c.b16 %v763, %v760
  %v902 = vpack.c.b16 %v767, %v764
  %v903 = vpack.c.b16 %v768, %v765
  %v904 = vpack.c.b16 %v769, %v766
  %v905 = vpack.c.b16 %v773, %v770
  %v906 = vpack.c.b16 %v774, %v771
  %v907 = vpack.c.b16 %v775, %v772
  %v908 = vpack.c.b16 %v779, %v776
  %v909 = vpack.c.b16 %v780, %v777
  %v910 = vpack.c.b16 %v781, %v778
  %v911 = vpack.c.b16 %v785, %v782
  %v912 = vpack.c.b16 %v786, %v783
  %v913 = vpack.c.b16 %v787, %v784
  %v914 = vpack.c.b16 %v791, %v788
  %v915 = vpack.c.b16 %v792, %v789
  %v916 = vpack.c.b16 %v793, %v790
  %v917 = vpack.c.b16 %v797, %v794
  %v918 = vpack.c.b16 %v798, %v795
  %v919 = vpack.c.b16 %v799, %v796
  %v920 = vpack.c.b16 %v803, %v800
  %v921 = vpack.c.b16 %v804, %v801
  %v922 = vpack.c.b16 %v805, %v802
  %v923 = vpack.c.b16 %v809, %v806
  %v924 = vpack.c.b16 %v810, %v807
  %v925 = vpack.c.b16 %v811, %v808
  %v926 = vpack.c.b16 %v815, %v812
  %v927 = vpack.c.b16 %v816, %v813
  %v928 = vpack.c.b16 %v817, %v814
  %v929 = vpack.c.b16 %v821, %v818
  %v930 = vpack.c.b16 %v822, %v819
  %v931 = vpack.c.b16 %v823, %v820
  %v932 = vpack.c.b16 %v827, %v824
  %v933 = vpack.c.b16 %v828, %v825
  %v934 = vpack.c.b16 %v829, %v826
  %v935 = vpack.c.b16 %v833, %v830
  %v936 = vpack.c.b16 %v834, %v831
  %v937 = vpack.c.b16 %v835, %v832
  %v938 = vpack.c.b16 %v839, %v836
  %v939 = vpack.c.b16 %v840, %v837
  %v940 = vpack.c.b16 %v841, %v838
  %v941 = vpack.c.b16 %v845, %v842
  %v942 = vpack.c.b16 %v846, %v843
  %v943 = vpack.c.b16 %v847, %v844
  %v944 = vpack.c.b16 %v851, %v848
  %v945 = vpack.c.b16 %v852, %v849
  %v946 = vpack.c.b16 %v853, %v850
  %v947 = vpack.c.b16 %v857, %v854
  %v948 = vpack.c.b16 %v858, %v855
  %v949 = vpack.c.b16 %v859, %v856
  %v950 = vpack.c.b16 %v863, %v860
  %v951 = vpack.c.b16 %v864, %v861
  %v952 = vpack.c.b16 %v865, %v862
  %v953 = vpack.c.b16 %v869, %v866
  %v954 = vpack.c.b16 %v870, %v867
  %v955 = vpack.c.b16 %v871, %v868
  %v956 = vpack.c.b16 %v875, %v872
  %v957 = vpack.c.b16 %v876, %v873
  %v958 = vpack.c.b16 %v877, %v874
  %v959 = vpack.c.b16 %v881, %v878
  %v960 = vpack.c.b16 %v882, %v879
  %v961 = vpack.c.b16 %v883, %v880
  %v962 = vpack.c.b16 %v887, %v884
  %v963 = vpack.c.b16 %v888, %v885
  %v964 = vpack.c.b16 %v889, %v886
  %v965 = vpack.c.b16 %v893, %v890
  %v966 = vpack.c.b16 %v894, %v891
  %v967 = vpack.c.b16 %v895, %v892
  %1040 = vmatpush.bf16.msra.mxu0 %v917
  %1041 = vmatpush.bf16.msra.mxu0 %v914
  %1042 = vmatpush.bf16.msra.mxu0 %v911
  %1043 = vmatpush.bf16.msra.mxu0 %v908
  %1044 = vmatpush.bf16.msra.mxu0 %v905
  %1045 = vmatpush.bf16.msra.mxu0 %v902
  %1046 = vmatpush.bf16.msra.mxu0 %v899
  %1047 = vmatpush.bf16.msra.mxu0 %v896
  %1048 = vmatmul.bf16.gmra.mxu0 %v549
  %v1049 = vpop.f32.mrf.mxu0
  %v1050 = vadd.f32 %v650, %v1049
  %v1051 = vpop.f32.mrf.mxu0
  %1052 = vdwg.mxu0
  %1053 = vmatpush.bf16.msra.mxu0 %v941
  %1054 = vmatpush.bf16.msra.mxu0 %v938
  %1055 = vmatpush.bf16.msra.mxu0 %v935
  %1056 = vmatpush.bf16.msra.mxu0 %v932
  %1057 = vmatpush.bf16.msra.mxu0 %v929
  %1058 = vmatpush.bf16.msra.mxu0 %v926
  %1059 = vmatpush.bf16.msra.mxu0 %v923
  %1060 = vmatpush.bf16.msra.mxu0 %v920
  %1061 = vmatmul.bf16.gmra.mxu0 %v550
  %v1062 = vpop.f32.mrf.mxu0
  %v1063 = vadd.f32 %v1050, %v1062
  %v1064 = vpop.f32.mrf.mxu0
  %1065 = vdwg.mxu0
  %1066 = vmatpush.bf16.msra.mxu0 %v965
  %1067 = vmatpush.bf16.msra.mxu0 %v962
  %1068 = vmatpush.bf16.msra.mxu0 %v959
  %1069 = vmatpush.bf16.msra.mxu0 %v956
  %1070 = vmatpush.bf16.msra.mxu0 %v953
  %1071 = vmatpush.bf16.msra.mxu0 %v950
  %1072 = vmatpush.bf16.msra.mxu0 %v947
  %1073 = vmatpush.bf16.msra.mxu0 %v944
  %1074 = vmatmul.bf16.gmra.mxu0 %v551
  %v1075 = vpop.f32.mrf.mxu0
  %v1076 = vadd.f32 %v1063, %v1075
  %v1077 = vpop.f32.mrf.mxu0
  %1078 = vdwg.mxu0
  %1079 = vmatpush.bf16.msra.mxu0 %v918
  %1080 = vmatpush.bf16.msra.mxu0 %v915
  %1081 = vmatpush.bf16.msra.mxu0 %v912
  %1082 = vmatpush.bf16.msra.mxu0 %v909
  %1083 = vmatpush.bf16.msra.mxu0 %v906
  %1084 = vmatpush.bf16.msra.mxu0 %v903
  %1085 = vmatpush.bf16.msra.mxu0 %v900
  %1086 = vmatpush.bf16.msra.mxu0 %v897
  %1087 = vmatmul.bf16.gmra.mxu0 %v549
  %v1088 = vpop.f32.mrf.mxu0
  %v1089 = vadd.f32 %v651, %v1088
  %v1090 = vpop.f32.mrf.mxu0
  %1091 = vdwg.mxu0
  %1092 = vmatpush.bf16.msra.mxu0 %v942
  %1093 = vmatpush.bf16.msra.mxu0 %v939
  %1094 = vmatpush.bf16.msra.mxu0 %v936
  %1095 = vmatpush.bf16.msra.mxu0 %v933
  %1096 = vmatpush.bf16.msra.mxu0 %v930
  %1097 = vmatpush.bf16.msra.mxu0 %v927
  %1098 = vmatpush.bf16.msra.mxu0 %v924
  %1099 = vmatpush.bf16.msra.mxu0 %v921
  %1100 = vmatmul.bf16.gmra.mxu0 %v550
  %v1101 = vpop.f32.mrf.mxu0
  %v1102 = vadd.f32 %v1089, %v1101
  %v1103 = vpop.f32.mrf.mxu0
  %1104 = vdwg.mxu0
  %1105 = vmatpush.bf16.msra.mxu0 %v966
  %1106 = vmatpush.bf16.msra.mxu0 %v963
  %1107 = vmatpush.bf16.msra.mxu0 %v960
  %1108 = vmatpush.bf16.msra.mxu0 %v957
  %1109 = vmatpush.bf16.msra.mxu0 %v954
  %1110 = vmatpush.bf16.msra.mxu0 %v951
  %1111 = vmatpush.bf16.msra.mxu0 %v948
  %1112 = vmatpush.bf16.msra.mxu0 %v945
  %1113 = vmatmul.bf16.gmra.mxu0 %v551
  %v1114 = vpop.f32.mrf.mxu0
  %v1115 = vadd.f32 %v1102, %v1114
  %v1116 = vpop.f32.mrf.mxu0
  %1117 = vdwg.mxu0
  %1118 = vmatpush.bf16.msra.mxu0 %v919
  %1119 = vmatpush.bf16.msra.mxu0 %v916
  %1120 = vmatpush.bf16.msra.mxu0 %v913
  %1121 = vmatpush.bf16.msra.mxu0 %v910
  %1122 = vmatpush.bf16.msra.mxu0 %v907
  %1123 = vmatpush.bf16.msra.mxu0 %v904
  %1124 = vmatpush.bf16.msra.mxu0 %v901
  %1125 = vmatpush.bf16.msra.mxu0 %v898
  %1126 = vmatmul.bf16.gmra.mxu0 %v549
  %v1127 = vpop.f32.mrf.mxu0
  %v1128 = vadd.f32 %v652, %v1127
  %v1129 = vpop.f32.mrf.mxu0
  %1130 = vdwg.mxu0
  %1131 = vmatpush.bf16.msra.mxu0 %v943
  %1132 = vmatpush.bf16.msra.mxu0 %v940
  %1133 = vmatpush.bf16.msra.mxu0 %v937
  %1134 = vmatpush.bf16.msra.mxu0 %v934
  %1135 = vmatpush.bf16.msra.mxu0 %v931
  %1136 = vmatpush.bf16.msra.mxu0 %v928
  %1137 = vmatpush.bf16.msra.mxu0 %v925
  %1138 = vmatpush.bf16.msra.mxu0 %v922
  %1139 = vmatmul.bf16.gmra.mxu0 %v550
  %v1140 = vpop.f32.mrf.mxu0
  %v1141 = vadd.f32 %v1128, %v1140
  %v1142 = vpop.f32.mrf.mxu0
  %1143 = vdwg.mxu0
  %1144 = vmatpush.bf16.msra.mxu0 %v967
  %1145 = vmatpush.bf16.msra.mxu0 %v964
  %1146 = vmatpush.bf16.msra.mxu0 %v961
  %1147 = vmatpush.bf16.msra.mxu0 %v958
  %1148 = vmatpush.bf16.msra.mxu0 %v955
  %1149 = vmatpush.bf16.msra.mxu0 %v952
  %1150 = vmatpush.bf16.msra.mxu0 %v949
  %1151 = vmatpush.bf16.msra.mxu0 %v946
  %1152 = vmatmul.bf16.gmra.mxu0 %v551
  %v1153 = vpop.f32.mrf.mxu0
  %v1154 = vadd.f32 %v1141, %v1153
  %v1155 = vpop.f32.mrf.mxu0
  %1156 = vdwg.mxu0
  %v1157 = vld [vmem:[%s1] sm:$0xff]
  %v1158 = vld [vmem:[%s1 + $0x8] sm:$0xff]
  %v1159 = vld [vmem:[%s1 + $0x10] sm:$0xff]
  %v1160 = vmul.f32 %v1076, %v1157
  %v1161 = vmul.f32 %v1115, %v1158
  %v1162 = vmul.f32 %v1154, %v1159
  %v1163 = vadd.f32 %v1160, %v1161
  %v1164 = vsel %vm415, %v1162, 0.0
  %v1165 = vadd.f32 %v1163, %v1164
  %1166 = vadd.xlane.f32.xlu0 %v1165
  %v1167 = vpop.xlane.xlu0 %1166
  %v1168 = vmul.f32 %v1076, %v1076
  %v1169 = vmul.f32 %v1115, %v1115
  %v1170 = vmul.f32 %v1154, %v1154
  %v1171 = vadd.f32 %v1168, %v1169
  %v1172 = vsel %vm415, %v1170, 0.0
  %v1173 = vadd.f32 %v1171, %v1172
  %1174 = vadd.xlane.f32.xlu0 %v1173
  %v1175 = vpop.xlane.xlu0 %1174
  %v1176 = vrsqrt.pop %v1175
  %v1177 = vmul.f32 %v1176, %v1175
  %v1178 = vmul.f32 %v1177, %v1176
  %v1179 = vmul.f32 0.5, %v1178
  %v1180 = vsub.f32 1.5, %v1179
  %v1181 = vmul.f32 %v1176, %v1180
  %vm1182 = vweird.f32 %v1175
  %vm1183 = vweird.f32 %v1176
  %vm1184 = vmor %vm1182, %vm1183
  %v1185 = vsel %vm1184, %v1176, %v1181
  %v1186 = vmul.f32 %v1157, %v1157
  %v1187 = vmul.f32 %v1158, %v1158
  %v1188 = vmul.f32 %v1159, %v1159
  %v1189 = vadd.f32 %v1186, %v1187
  %v1190 = vsel %vm415, %v1188, 0.0
  %v1191 = vadd.f32 %v1189, %v1190
  %1192 = vadd.xlane.f32.xlu0 %v1191
  %v1193 = vpop.xlane.xlu0 %1192
  %v1194 = vrsqrt.pop %v1193
  %v1195 = vmul.f32 %v1194, %v1193
  %v1196 = vmul.f32 %v1195, %v1194
  %v1197 = vmul.f32 0.5, %v1196
  %v1198 = vsub.f32 1.5, %v1197
  %v1199 = vmul.f32 %v1194, %v1198
  %vm1200 = vweird.f32 %v1193
  %vm1201 = vweird.f32 %v1194
  %vm1202 = vmor %vm1200, %vm1201
  %v1203 = vsel %vm1202, %v1194, %v1199
  %v1204 = vmul.f32 %v1167, %v1185
  %v1205 = vmul.f32 %v1204, %v1203
  %v1206 = vsub.f32 1.0, %v1205
  %v1207 = vmul.f32 %v1206, 0.5
  %vm1208 = vcmask 7168
  %1209 = vst.msk [vmem:[%s6] sm:$0xff] %vm1208, %v1207
  // Predicated region
  $region26: #{semantic_loss.1} parent=0 // pred_check
    _
  $region27: #{semantic_loss.1} parent=0 // pred_check_branch
    %1211 = sbr.rel (0) target = $region29
  $region28: #{semantic_loss.1} parent=0 // pred_region
    _
  $region29: #{semantic_loss.1} parent=0 // pred_fallthru
    _
  // Predicated region
  $region30: #{semantic_loss.1} parent=0 // pred_check
    _
  $region31: #{semantic_loss.1} parent=0 // pred_check_branch
    %1213 = sbr.rel (0) target = $region33
  $region32: #{semantic_loss.1} parent=0 // pred_region
    _
  $region33: #{semantic_loss.1} parent=0 // pred_fallthru
    _

</llo_original>
